<compile_context>
chip_gen: v6e
topology: v6e:2x2x1
jax: 0.10.0
libtpu: 0.0.40
codegen_flags: <defaults>
</compile_context>

<pallas_src>
import functools

import jax
import jax.numpy as jnp
from jax import lax
from jax.experimental import pallas as pl
from jax.experimental.pallas import tpu as pltpu

_NEG_INF = -1e9


def _vmem_capacity_bytes():
    """Physical VMEM per TensorCore; conservative fallback if the query fails."""
    try:
        info = pltpu.get_tpu_info()
        cap = getattr(info, "vmem_capacity_bytes", None)
        if cap:
            return int(cap)
    except Exception:
        pass
    return 64 * 1024 * 1024  # v7x-sized assumption (smallest of the three generations)


# --------------------------------------------------------------------------------------
# Single-pass kernel: full key/value length resident per (b, h); q dimension tiled.
# --------------------------------------------------------------------------------------
def _sdpa_kernel(*refs, inv_temperature, has_mask, emit_attn, compute_dtype):
    """Refs (leading (b, h) block dims squeezed away):
         q_ref: (Tq, Dk), k_ref: (Lk, Dk), v_ref: (Lk, Dv),
         [bias_ref: (Tq, Lk) f32], out_ref: (Tq, Dv), [attn_ref: (Tq, Lk)].
    """
    it = iter(refs)
    q_ref = next(it)
    k_ref = next(it)
    v_ref = next(it)
    bias_ref = next(it) if has_mask else None
    out_ref = next(it)
    attn_ref = next(it) if emit_attn else None

    qv = q_ref[...]
    kv = k_ref[...]
    vv = v_ref[...]
    if qv.dtype != compute_dtype:       # f32 inputs -> bf16 MXU feeds (f32 accumulate)
        qv = qv.astype(compute_dtype)
        kv = kv.astype(compute_dtype)
        vv = vv.astype(compute_dtype)
    qv = qv * jnp.asarray(inv_temperature, dtype=compute_dtype)

    # Contract last dims of q and k: no explicit k transpose is formed.
    scores = lax.dot_general(qv, kv,
                             dimension_numbers=(((1,), (1,)), ((), ())),
                             preferred_element_type=jnp.float32)       # (Tq, Lk) f32
    if has_mask:
        scores = scores + bias_ref[...]                                # additive 0/-1e9

    smax = jnp.max(scores, axis=-1, keepdims=True)
    p = jnp.exp(scores - smax)
    denom = jnp.sum(p, axis=-1, keepdims=True)

    # TODO(synk): nn.Dropout(0.1) is identity in eval mode; training-mode dropout
    # (pltpu.prng_seed / pltpu.prng_random_bits) intentionally omitted.

    if emit_attn:
        attn = p * pl.reciprocal(denom, approx=False)      # exact, attn is returned
        out = jnp.dot(attn.astype(vv.dtype), vv, preferred_element_type=jnp.float32)
        out_ref[...] = out.astype(out_ref.dtype)
        attn_ref[...] = attn.astype(attn_ref.dtype)
    else:
        # Fast path: normalize AFTER the AV matmul (Tq*Dv instead of Tq*Lk multiplies),
        # approx reciprocal goes to the EUP slot.
        out = jnp.dot(p.astype(vv.dtype), vv, preferred_element_type=jnp.float32)
        out_ref[...] = (out * pl.reciprocal(denom, approx=True)).astype(out_ref.dtype)


# --------------------------------------------------------------------------------------
# Flash-style kernel: kv axis tiled with online softmax (output-only path).
# --------------------------------------------------------------------------------------
def _flash_sdpa_kernel(*refs, inv_temperature, has_mask, compute_dtype):
    """Refs: q (Tq, Dk), k (Tkv, Dk), v (Tkv, Dv), [bias (Tq, Tkv) f32], out (Tq, Dv),
       scratch: m (Tq, 1) f32, l (Tq, 1) f32, acc (Tq, Dv) f32."""
    it = iter(refs)
    q_ref = next(it)
    k_ref = next(it)
    v_ref = next(it)
    bias_ref = next(it) if has_mask else None
    out_ref = next(it)
    m_sc = next(it)
    l_sc = next(it)
    acc_sc = next(it)

    kv_idx = pl.program_id(3)

    @pl.when(kv_idx == 0)
    def _():
        m_sc[...] = jnp.full(m_sc.shape, -jnp.inf, dtype=m_sc.dtype)
        l_sc[...] = jnp.zeros(l_sc.shape, dtype=l_sc.dtype)
        acc_sc[...] = jnp.zeros(acc_sc.shape, dtype=acc_sc.dtype)

    qv = q_ref[...]
    kv = k_ref[...]
    vv = v_ref[...]
    if qv.dtype != compute_dtype:
        qv = qv.astype(compute_dtype)
        kv = kv.astype(compute_dtype)
        vv = vv.astype(compute_dtype)
    qv = qv * jnp.asarray(inv_temperature, dtype=compute_dtype)

    s = lax.dot_general(qv, kv,
                        dimension_numbers=(((1,), (1,)), ((), ())),
                        preferred_element_type=jnp.float32)            # (Tq, Tkv) f32
    if has_mask:
        s = s + bias_ref[...]

    m_prev = m_sc[...]
    m_new = jnp.maximum(m_prev, jnp.max(s, axis=-1, keepdims=True))
    alpha = jnp.exp(m_prev - m_new)
    p = jnp.exp(s - m_new)
    l_sc[...] = alpha * l_sc[...] + jnp.sum(p, axis=-1, keepdims=True)
    acc_sc[...] = alpha * acc_sc[...] + jnp.dot(p.astype(vv.dtype), vv,
                                                preferred_element_type=jnp.float32)
    m_sc[...] = m_new

    @pl.when(kv_idx == pl.num_programs(3) - 1)
    def _():
        out_ref[...] = (acc_sc[...] * pl.reciprocal(l_sc[...], approx=True)
                        ).astype(out_ref.dtype)


# --------------------------------------------------------------------------------------
# Tile selection
# --------------------------------------------------------------------------------------
def _pick_q_tile_single(Lq, Lk, Dk, Dv, itemsize, has_mask, emit_attn, budget_bytes):
    # Cap at 256 when emitting the attention matrix (extra (Tq, Lk) output tile + temp).
    preferred = (256, 128) if emit_attn else (512, 256, 128)
    tq = Lq
    for cand in preferred:
        if Lq % cand == 0:
            tq = cand
            break

    def footprint(t):
        blocks = (t * Dk + Lk * Dk + Lk * Dv + t * Dv) * itemsize
        if has_mask:
            blocks += t * Lk * 4                 # f32 additive-bias tile
        if emit_attn:
            blocks += t * Lk * itemsize          # attention-matrix output tile
        temps = 2 * t * Lk * 4 + t * Dv * 4      # f32 scores/p + f32 out temp
        if emit_attn:
            temps += t * Lk * 4                  # f32 attn temp
        return 2 * blocks + temps                # double-buffered blocks + temporaries

    while footprint(tq) > budget_bytes and tq % 16 == 0 and tq > 128:
        tq //= 2
    return tq


def _pick_tiles_flash(Lq, Lk, Dk, Dv, itemsize, has_mask, budget_bytes, tkv_override):
    tkv = tkv_override
    if tkv is None:
        for cand in (512, 256, 128):
            if Lk % cand == 0:
                tkv = cand
                break
    if tkv is None or Lk % tkv != 0 or tkv % 8 != 0:
        return None, None

    tq = Lq
    for cand in (512, 256, 128):
        if Lq % cand == 0:
            tq = cand
            break

    def footprint(t):
        blocks = (t * Dk + tkv * Dk + tkv * Dv + t * Dv) * itemsize
        if has_mask:
            blocks += t * tkv * 4
        temps = 2 * t * tkv * 4
        scratch = (2 * t + t * Dv) * 4
        return 2 * blocks + temps + scratch

    while footprint(tq) > budget_bytes and tq % 16 == 0 and tq > 128:
        tq //= 2
    return tq, tkv


# --------------------------------------------------------------------------------------
# Wrapper
# --------------------------------------------------------------------------------------
def scaled_dot_product_attention(q, k, v, temperature, mask=None, *,
                                 return_attn=True,
                                 attn_dtype=jnp.bfloat16,
                                 prefer_bf16_matmul=True,
                                 use_flash=None,
                                 flash_kv_threshold=2048,
                                 flash_block_kv=None):
    """q: (B,H,Lq,Dk), k: (B,H,Lk,Dk), v: (B,H,Lk,Dv).
       mask: None, (Lq,Lk), (B,Lq,Lk) or broadcastable 4-D (kept un-broadcast over B,H).
       Returns (output, attn) where attn is None when return_attn=False."""
    B, H, Lq, Dk = q.shape
    Lk = k.shape[2]
    Dv = v.shape[3]
    has_mask = mask is not None
    if attn_dtype is None:
        attn_dtype = q.dtype

    compute_dtype = jnp.dtype(q.dtype)
    if prefer_bf16_matmul and compute_dtype == jnp.dtype(jnp.float32):
        compute_dtype = jnp.dtype(jnp.bfloat16)   # native MXU rate; f32 accumulation kept

    inv_temperature = 1.0 / float(temperature)
    itemsize = q.dtype.itemsize

    # Per-generation VMEM sizing (v5e/v6e: 128 MiB -> ~38/96 MiB; v7x: 64 MiB -> ~19/48).
    vmem_cap = _vmem_capacity_bytes()
    budget_bytes = max(8 << 20, int(vmem_cap * 0.30))
    vmem_limit = int(min(int(vmem_cap * 0.75), vmem_cap - (8 << 20)))

    # ------------------------------------------------------------------ mask -> bias
    bias = None
    mB = mH = 1
    if has_mask:
        m = jnp.asarray(mask)
        if m.ndim == 2:            # (Lq, Lk)
            m = m[None, None]
        elif m.ndim == 3:          # (B, Lq, Lk): insert head axis (not batch!)
            m = m[:, None]
        elif m.ndim != 4:
            raise ValueError(f"mask rank must be 2, 3 or 4, got {m.ndim}")
        mB, mH = int(m.shape[0]), int(m.shape[1])
        # Additive bias (0 keep / -1e9 masked). Only the (Lq, Lk) dims are expanded;
        # the (B, H) broadcast dims stay size-1 so HBM traffic stays tiny.
        bias = jnp.where(m == 0, jnp.float32(_NEG_INF), jnp.float32(0.0))
        bias = jnp.broadcast_to(bias, (mB, mH, Lq, Lk))

    # ------------------------------------------------------------------ cost estimate
    flops = 2 * B * H * Lq * Lk * (Dk + Dv)
    bytes_accessed = (q.size + k.size + v.size) * itemsize + B * H * Lq * Dv * itemsize
    if has_mask:
        bytes_accessed += mB * mH * Lq * Lk * 4
    if return_attn:
        bytes_accessed += B * H * Lq * Lk * jnp.dtype(attn_dtype).itemsize
    cost = pl.CostEstimate(flops=flops, transcendentals=B * H * Lq * Lk,
                           bytes_accessed=bytes_accessed)

    # ------------------------------------------------------------------ flash path
    want_flash = use_flash if use_flash is not None else (Lk >= flash_kv_threshold)
    if want_flash and not return_attn:
        tq, tkv = _pick_tiles_flash(Lq, Lk, Dk, Dv, itemsize, has_mask,
                                    budget_bytes, flash_block_kv)
        if tkv is not None:
            nq, nkv = Lq // tq, Lk // tkv
            grid = (B, H, nq, nkv)
            in_specs = [
                pl.BlockSpec((None, None, tq, Dk), lambda b, h, qi, ki: (b, h, qi, 0)),
                pl.BlockSpec((None, None, tkv, Dk), lambda b, h, qi, ki: (b, h, ki, 0)),
                pl.BlockSpec((None, None, tkv, Dv), lambda b, h, qi, ki: (b, h, ki, 0)),
            ]
            args = [q, k, v]
            if has_mask:
                in_specs.append(pl.BlockSpec(
                    (None, None, tq, tkv),
                    lambda b, h, qi, ki: (b if mB > 1 else 0, h if mH > 1 else 0, qi, ki)))
                args.append(bias)

            kernel = functools.partial(
                _flash_sdpa_kernel, inv_temperature=inv_temperature,
                has_mask=has_mask, compute_dtype=compute_dtype)
            out = pl.pallas_call(
                kernel,
                out_shape=jax.ShapeDtypeStruct((B, H, Lq, Dv), q.dtype),
                grid=grid,
                in_specs=in_specs,
                out_specs=pl.BlockSpec((None, None, tq, Dv),
                                       lambda b, h, qi, ki: (b, h, qi, 0)),
                scratch_shapes=[pltpu.VMEM((tq, 1), jnp.float32),
                                pltpu.VMEM((tq, 1), jnp.float32),
                                pltpu.VMEM((tq, Dv), jnp.float32)],
                compiler_params=pltpu.CompilerParams(
                    dimension_semantics=("parallel", "parallel", "parallel", "arbitrary"),
                    vmem_limit_bytes=vmem_limit),
                cost_estimate=cost,
            )(*args)
            return out, None

    # ------------------------------------------------------------------ single-pass path
    tq = _pick_q_tile_single(Lq, Lk, Dk, Dv, itemsize, has_mask, return_attn, budget_bytes)
    nq = Lq // tq
    grid = (B, H, nq)

    # K/V blocks are reused across all q-tiles of a (b, h); when they are big, single-
    # buffer them: one exposed DMA per (b, h) buys back Lk*(Dk+Dv) bytes of VMEM.
    kv_bytes = Lk * (Dk + Dv) * itemsize
    kv_kwargs = {"pipeline_mode": pl.Buffered(1)} if kv_bytes > (4 << 20) else {}

    in_specs = [
        pl.BlockSpec((None, None, tq, Dk), lambda b, h, qi: (b, h, qi, 0)),
        pl.BlockSpec((None, None, Lk, Dk), lambda b, h, qi: (b, h, 0, 0), **kv_kwargs),
        pl.BlockSpec((None, None, Lk, Dv), lambda b, h, qi: (b, h, 0, 0), **kv_kwargs),
    ]
    args = [q, k, v]
    if has_mask:
        in_specs.append(pl.BlockSpec(
            (None, None, tq, Lk),
            lambda b, h, qi: (b if mB > 1 else 0, h if mH > 1 else 0, qi, 0)))
        args.append(bias)

    if return_attn:
        out_shape = (jax.ShapeDtypeStruct((B, H, Lq, Dv), q.dtype),
                     jax.ShapeDtypeStruct((B, H, Lq, Lk), attn_dtype))
        out_specs = (pl.BlockSpec((None, None, tq, Dv), lambda b, h, qi: (b, h, qi, 0)),
                     pl.BlockSpec((None, None, tq, Lk), lambda b, h, qi: (b, h, qi, 0)))
    else:
        out_shape = jax.ShapeDtypeStruct((B, H, Lq, Dv), q.dtype)
        out_specs = pl.BlockSpec((None, None, tq, Dv), lambda b, h, qi: (b, h, qi, 0))

    # TODO(synk): for Dv < 128 and return_attn=False, a head-grouped lane-dense output
    # tile (>=128 lanes) would avoid masked partial stores; omitted to keep VMEM low.

    kernel = functools.partial(
        _sdpa_kernel, inv_temperature=inv_temperature, has_mask=has_mask,
        emit_attn=return_attn, compute_dtype=compute_dtype)

    result = pl.pallas_call(
        kernel,
        out_shape=out_shape,
        grid=grid,
        in_specs=in_specs,
        out_specs=out_specs,
        compiler_params=pltpu.CompilerParams(
            dimension_semantics=("parallel", "parallel", "parallel"),
            vmem_limit_bytes=vmem_limit),
        cost_estimate=cost,
    )(*args)

    if return_attn:
        out, attn = result
        return out, attn
    return result, None


# --------------------------------------------------------------------------------------
# Reference + self-test
# --------------------------------------------------------------------------------------
def _reference(q, k, v, temperature, mask=None):
    scores = jnp.einsum("bhqd,bhkd->bhqk", q / temperature, k)
    if mask is not None:
        scores = jnp.where(mask == 0, -1e9, scores)
    attn = jax.nn.softmax(scores, axis=-1)
    out = jnp.einsum("bhqk,bhkd->bhqd", attn, v)
    return out, attn


if __name__ == "__main__":
    B, H, L, Dk = 2, 2, 8, 32
    temperature = Dk ** 0.5

    keys = jax.random.split(jax.random.PRNGKey(0), 6)
    q = jax.random.normal(keys[0], (B, H, L, Dk), dtype=jnp.float32)
    k = jax.random.normal(keys[1], (B, H, L, Dk), dtype=jnp.float32)
    v = jax.random.normal(keys[2], (B, H, L, Dk), dtype=jnp.float32)
    mask = jnp.tril(jnp.ones((L, L), dtype=jnp.float32))[None, None]  # (1,1,L,L)

    ref_out, ref_attn = _reference(q, k, v, temperature, mask=mask)

    # 1) Strict-parity path: f32 MXU feeds + f32 attention matrix.
    out, attn = scaled_dot_product_attention(q, k, v, temperature, mask=mask,
                                             attn_dtype=jnp.float32,
                                             prefer_bf16_matmul=False)
    out, attn = jax.block_until_ready(out), jax.block_until_ready(attn)
    assert jnp.allclose(out, ref_out, atol=1e-4, rtol=1e-4)
    assert jnp.allclose(attn, ref_attn, atol=1e-4, rtol=1e-4)

    # 2) Default fast path: bf16 MXU feeds + bf16 attention writeback.
    out_f, attn_f = scaled_dot_product_attention(q, k, v, temperature, mask=mask)
    jax.block_until_ready(out_f)
    assert jnp.allclose(out_f, ref_out, atol=3e-2, rtol=3e-2)
    assert jnp.allclose(attn_f.astype(jnp.float32), ref_attn, atol=3e-2, rtol=3e-2)

    # 3) Output-only fast path: no attention writeback, post-matmul normalization.
    out_o, attn_o = scaled_dot_product_attention(q, k, v, temperature, mask=mask,
                                                 return_attn=False)
    jax.block_until_ready(out_o)
    assert attn_o is None
    assert jnp.allclose(out_o, ref_out, atol=3e-2, rtol=3e-2)

    # 4) No-mask strict path.
    out_nm, attn_nm = scaled_dot_product_attention(q, k, v, temperature, mask=None,
                                                   attn_dtype=jnp.float32,
                                                   prefer_bf16_matmul=False)
    jax.block_until_ready(out_nm)
    ref_out_nm, ref_attn_nm = _reference(q, k, v, temperature, mask=None)
    assert jnp.allclose(out_nm, ref_out_nm, atol=1e-4, rtol=1e-4)
    assert jnp.allclose(attn_nm, ref_attn_nm, atol=1e-4, rtol=1e-4)

    # 5) Flash-style kv-tiled path (forced, 2 kv blocks) at a small-but-tileable shape.
    Lf = 256
    qf = jax.random.normal(keys[3], (B, H, Lf, Dk), dtype=jnp.float32)
    kf = jax.random.normal(keys[4], (B, H, Lf, Dk), dtype=jnp.float32)
    vf = jax.random.normal(keys[5], (B, H, Lf, Dk), dtype=jnp.float32)
    maskf = jnp.tril(jnp.ones((Lf, Lf), dtype=jnp.float32))[None, None]
    out_fl, attn_fl = scaled_dot_product_attention(qf, kf, vf, temperature, mask=maskf,
                                                   return_attn=False, use_flash=True,
                                                   flash_block_kv=128)
    jax.block_until_ready(out_fl)
    assert attn_fl is None
    ref_out_fl, _ = _reference(qf, kf, vf, temperature, mask=maskf)
    assert jnp.allclose(out_fl, ref_out_fl, atol=3e-2, rtol=3e-2)

    print("KERNEL_OK")
</pallas_src>

<mosaic_0001>
module attributes {stable_mosaic.version = 11 : i64} {
  func.func @_sdpa_kernel(%arg0: i32, %arg1: i32, %arg2: i32, %arg3: memref<1x1x8x32xf32, #tpu.memory_space<vmem>>, %arg4: memref<1x1x8x32xf32, #tpu.memory_space<vmem>>, %arg5: memref<1x1x8x32xf32, #tpu.memory_space<vmem>>, %arg6: memref<1x1x8x8xf32, #tpu.memory_space<vmem>>, %arg7: memref<1x1x8x32xf32, #tpu.memory_space<vmem>>, %arg8: memref<1x1x8x8xf32, #tpu.memory_space<vmem>>) attributes {dimension_semantics = [#tpu.dimension_semantics<parallel>, #tpu.dimension_semantics<parallel>, #tpu.dimension_semantics<parallel>], iteration_bounds = array<i64: 2, 2, 1>, scalar_prefetch = 0 : i64, scratch_operands = 0 : i64, tpu.core_type = #tpu.core_type<tc>, window_params = [{transform_indices = @transform_0, window_bounds = array<i64: 1, 1, 8, 32>}, {transform_indices = @transform_1, window_bounds = array<i64: 1, 1, 8, 32>}, {transform_indices = @transform_2, window_bounds = array<i64: 1, 1, 8, 32>}, {transform_indices = @transform_3, window_bounds = array<i64: 1, 1, 8, 8>}, {transform_indices = @transform_4, window_bounds = array<i64: 1, 1, 8, 32>}, {transform_indices = @transform_5, window_bounds = array<i64: 1, 1, 8, 8>}]} {
    %c0 = arith.constant 0 : index
    %c0_0 = arith.constant 0 : index
    %c0_1 = arith.constant 0 : index
    %c0_2 = arith.constant 0 : index
    %0 = vector.load %arg3[%c0, %c0_0, %c0_1, %c0_2] : memref<1x1x8x32xf32, #tpu.memory_space<vmem>>, vector<1x1x8x32xf32>
    %1 = vector.shape_cast %0 : vector<1x1x8x32xf32> to vector<8x32xf32>
    %c0_3 = arith.constant 0 : index
    %c0_4 = arith.constant 0 : index
    %c0_5 = arith.constant 0 : index
    %c0_6 = arith.constant 0 : index
    %2 = vector.load %arg4[%c0_3, %c0_4, %c0_5, %c0_6] : memref<1x1x8x32xf32, #tpu.memory_space<vmem>>, vector<1x1x8x32xf32>
    %3 = vector.shape_cast %2 : vector<1x1x8x32xf32> to vector<8x32xf32>
    %c0_7 = arith.constant 0 : index
    %c0_8 = arith.constant 0 : index
    %c0_9 = arith.constant 0 : index
    %c0_10 = arith.constant 0 : index
    %4 = vector.load %arg5[%c0_7, %c0_8, %c0_9, %c0_10] : memref<1x1x8x32xf32, #tpu.memory_space<vmem>>, vector<1x1x8x32xf32>
    %5 = vector.shape_cast %4 : vector<1x1x8x32xf32> to vector<8x32xf32>
    %cst = arith.constant 0.176776692 : f32
    %6 = vector.broadcast %cst : f32 to vector<8x32xf32>
    %7 = arith.mulf %1, %6 : vector<8x32xf32>
    %cst_11 = arith.constant dense<0.000000e+00> : vector<8x8xf32>
    %8 = tpu.matmul %7, %3, %cst_11 {dimension_numbers = #tpu.dot_dimension_numbers<[1], [1], [0], [0], [0, 0, 1, 0], [], []>} : vector<8x32xf32>, vector<8x32xf32>, vector<8x8xf32> -> vector<8x8xf32>
    %c0_12 = arith.constant 0 : index
    %c0_13 = arith.constant 0 : index
    %c0_14 = arith.constant 0 : index
    %c0_15 = arith.constant 0 : index
    %9 = vector.load %arg6[%c0_12, %c0_13, %c0_14, %c0_15] : memref<1x1x8x8xf32, #tpu.memory_space<vmem>>, vector<1x1x8x8xf32>
    %10 = vector.shape_cast %9 : vector<1x1x8x8xf32> to vector<8x8xf32>
    %11 = arith.addf %8, %10 : vector<8x8xf32>
    %cst_16 = arith.constant dense<0xFF800000> : vector<8xf32>
    %12 = vector.multi_reduction <maximumf>, %11, %cst_16 [1] : vector<8x8xf32> to vector<8xf32>
    %13 = vector.shape_cast %12 : vector<8xf32> to vector<8x1xf32>
    %14 = vector.broadcast %13 : vector<8x1xf32> to vector<8x8xf32>
    %15 = arith.subf %11, %14 : vector<8x8xf32>
    %16 = math.exp %15 : vector<8x8xf32>
    %cst_17 = arith.constant dense<0.000000e+00> : vector<8xf32>
    %17 = vector.multi_reduction <add>, %16, %cst_17 [1] : vector<8x8xf32> to vector<8xf32>
    %18 = vector.shape_cast %17 : vector<8xf32> to vector<8x1xf32>
    %19 = tpu.reciprocal %18 : vector<8x1xf32> -> vector<8x1xf32>
    %20 = vector.broadcast %19 : vector<8x1xf32> to vector<8x8xf32>
    %21 = arith.mulf %16, %20 : vector<8x8xf32>
    %cst_18 = arith.constant dense<0.000000e+00> : vector<8x32xf32>
    %22 = tpu.matmul %21, %5, %cst_18 {dimension_numbers = #tpu.dot_dimension_numbers<[1], [0], [0], [1], [0, 0, 1, 1], [], []>} : vector<8x8xf32>, vector<8x32xf32>, vector<8x32xf32> -> vector<8x32xf32>
    %c0_19 = arith.constant 0 : index
    %c0_20 = arith.constant 0 : index
    %c0_21 = arith.constant 0 : index
    %c0_22 = arith.constant 0 : index
    %23 = vector.load %arg7[%c0_19, %c0_20, %c0_21, %c0_22] : memref<1x1x8x32xf32, #tpu.memory_space<vmem>>, vector<1x1x8x32xf32>
    %24 = vector.shape_cast %23 : vector<1x1x8x32xf32> to vector<8x32xf32>
    %25 = vector.shape_cast %22 : vector<8x32xf32> to vector<1x1x8x32xf32>
    tpu.vector_store %arg7[%c0_19, %c0_20, %c0_21, %c0_22], %25 {strides = array<i32>} : memref<1x1x8x32xf32, #tpu.memory_space<vmem>>, vector<1x1x8x32xf32>,
    %c0_23 = arith.constant 0 : index
    %c0_24 = arith.constant 0 : index
    %c0_25 = arith.constant 0 : index
    %c0_26 = arith.constant 0 : index
    %26 = vector.load %arg8[%c0_23, %c0_24, %c0_25, %c0_26] : memref<1x1x8x8xf32, #tpu.memory_space<vmem>>, vector<1x1x8x8xf32>
    %27 = vector.shape_cast %26 : vector<1x1x8x8xf32> to vector<8x8xf32>
    %28 = vector.shape_cast %21 : vector<8x8xf32> to vector<1x1x8x8xf32>
    tpu.vector_store %arg8[%c0_23, %c0_24, %c0_25, %c0_26], %28 {strides = array<i32>} : memref<1x1x8x8xf32, #tpu.memory_space<vmem>>, vector<1x1x8x8xf32>,
    return
  }
  func.func @transform_0(%arg0: i32, %arg1: i32, %arg2: i32) -> (i32, i32, i32, i32) {
    %c0_i32 = arith.constant 0 : i32
    %c0_i32_0 = arith.constant 0 : i32
    return %arg0, %arg1, %arg2, %c0_i32 : i32, i32, i32, i32
  }
  func.func @transform_1(%arg0: i32, %arg1: i32, %arg2: i32) -> (i32, i32, i32, i32) {
    %c0_i32 = arith.constant 0 : i32
    %c0_i32_0 = arith.constant 0 : i32
    %c0_i32_1 = arith.constant 0 : i32
    return %arg0, %arg1, %c0_i32, %c0_i32_0 : i32, i32, i32, i32
  }
  func.func @transform_2(%arg0: i32, %arg1: i32, %arg2: i32) -> (i32, i32, i32, i32) {
    %c0_i32 = arith.constant 0 : i32
    %c0_i32_0 = arith.constant 0 : i32
    %c0_i32_1 = arith.constant 0 : i32
    return %arg0, %arg1, %c0_i32, %c0_i32_0 : i32, i32, i32, i32
  }
  func.func @transform_3(%arg0: i32, %arg1: i32, %arg2: i32) -> (i32, i32, i32, i32) {
    %c0_i32 = arith.constant 0 : i32
    %c0_i32_0 = arith.constant 0 : i32
    %c0_i32_1 = arith.constant 0 : i32
    %c0_i32_2 = arith.constant 0 : i32
    return %c0_i32, %c0_i32_0, %arg2, %c0_i32_1 : i32, i32, i32, i32
  }
  func.func @transform_4(%arg0: i32, %arg1: i32, %arg2: i32) -> (i32, i32, i32, i32) {
    %c0_i32 = arith.constant 0 : i32
    %c0_i32_0 = arith.constant 0 : i32
    return %arg0, %arg1, %arg2, %c0_i32 : i32, i32, i32, i32
  }
  func.func @transform_5(%arg0: i32, %arg1: i32, %arg2: i32) -> (i32, i32, i32, i32) {
    %c0_i32 = arith.constant 0 : i32
    %c0_i32_0 = arith.constant 0 : i32
    return %arg0, %arg1, %arg2, %c0_i32 : i32, i32, i32, i32
  }
}

</mosaic_0001>

<llo_original>
// kernel: tpu_custom_call.1
$region0: #{tpu_custom_call.1}
  #allocation0 [shape = 'u32[]', space=smem, size = 0x4, offset = 0x4, fixed_abs, tag = 'smem constant byte address 0x4 - core index']
  #allocation1 [shape = 'u32[144,128]{1,0:T(1,128)}', space=vmem, size = 0x12000, scoped, tag = 'internal scratch']
  %s0 = inlined_call_operand.hbm [shape: f32[2,2,8,32], index: 0, kind: input, shape index: {}]
  %s1 = inlined_call_operand.hbm [shape: f32[2,2,8,32], index: 1, kind: input, shape index: {}]
  %s2 = inlined_call_operand.hbm [shape: f32[2,2,8,32], index: 2, kind: input, shape index: {}]
  %s3 = inlined_call_operand.hbm [shape: f32[1,1,8,8], index: 3, kind: input, shape index: {}]
  %s4 = inlined_call_operand.hbm [shape: f32[2,2,8,32], index: 4, kind: output, shape index: {0}]
  %s5 = inlined_call_operand.hbm [shape: f32[2,2,8,8], index: 5, kind: output, shape index: {1}]
  %6 = xla_tuple %s4, %s5
  %s7 = sld [smem:[#allocation0]]
  $region73: #{tpu_custom_call.1} parent=0
    _
  %s9 = ssub.s32 1, %s7
  %s10 = scalar_select 0, %s9, %s7
  $region1: #{tpu_custom_call.1} parent=0
    #allocation2 [shape = 'u8[8192]{0}', space=vmem, size = 0x2000, scoped, tag = 'input window, operand 0']
    #allocation3 [shape = 's32[2]{0}', space=sflag, size = 0x8, scoped, tag = 'scoped memory for tpu_custom_call.1']
    #allocation4 [shape = 's32[2]{0}', space=sflag, size = 0x8, scoped, tag = 'scoped memory for tpu_custom_call.1']
    #allocation5 [shape = 'u8[8192]{0}', space=vmem, size = 0x2000, scoped, tag = 'input window, operand 1']
    #allocation6 [shape = 's32[2]{0}', space=sflag, size = 0x8, scoped, tag = 'scoped memory for tpu_custom_call.1']
    #allocation7 [shape = 'u8[8192]{0}', space=vmem, size = 0x2000, scoped, tag = 'input window, operand 2']
    #allocation8 [shape = 'u8[4096]{0}', space=vmem, size = 0x1000, scoped, tag = 'input window, operand 3, single buffered']
    #allocation9 [shape = 's32[1]{0}', space=sflag, size = 0x4, scoped, tag = 'scoped memory for tpu_custom_call.1']
    #allocation10 [shape = 'u8[8192]{0}', space=vmem, size = 0x2000, scoped, tag = 'output window, operand 0']
    #allocation11 [shape = 'u8[8192]{0}', space=vmem, size = 0x2000, scoped, tag = 'output window, operand 1']
    #allocation12 [shape = 's32[2]{0}', space=sflag, size = 0x8, scoped, tag = 'scoped memory for tpu_custom_call.1']
    %11 = vsyncpa [#allocation3], 0
    %s12 = scalar_lea.sflag [#allocation3], 1
    %13 = vsyncpa %s12, 0
    %14 = vsyncpa [#allocation6], 0
    %s15 = scalar_lea.sflag [#allocation6], 1
    %16 = vsyncpa %s15, 0
    %17 = vsyncpa [#allocation9], 0
    %18 = vsyncpa [#allocation4], 0
    %s19 = scalar_lea.sflag [#allocation4], 1
    %20 = vsyncpa %s19, 0
    %21 = vsyncpa [#allocation12], 0
    %s22 = scalar_lea.sflag [#allocation12], 1
    %23 = vsyncpa %s22, 0
    loop: start=0, step=1, limit=6
    $region2: #{tpu_custom_call.1} parent=1 // loop_pre_header
      _
    $region3: #{tpu_custom_call.1} parent=1 // loop_header
      %s25 = sphi 0, %s29
      %p26 = scmp.ge.s32.totalorder %s25, 6
      %s32 = sphi 0, %s51
      %s33 = sphi 0, %s47
      %s34 = sphi 0, %s43
      %s35 = sphi 0, %s32
      %s36 = sphi 0, %s33
      %s37 = sphi 0, %s34
      %s38 = sphi 0, %s35
      %s39 = sphi 0, %s36
      %s40 = sphi 0, %s37
      %s58 = sphi 0, %s60
      %s61 = sphi 0, %s58
      %s62 = sphi 0, %s61
      %s78 = sphi 0, %s62
      %s86 = sphi 0, %s88
      %s89 = sphi 0, %s86
      %s90 = sphi 0, %s89
      %s106 = sphi 0, %s90
      %s114 = sphi 0, %s116
      %s117 = sphi 0, %s114
      %s118 = sphi 0, %s117
      %s134 = sphi 0, %s118
      %s140 = sphi 0, %s142
      %s143 = sphi 0, %s140
      %s144 = sphi 0, %s143
      %s160 = sphi 0, %s144
      %s170 = sphi 0, %s172
      %s173 = sphi 0, %s170
      %s174 = sphi 0, %s173
      %s190 = sphi 0, %s174
      %s200 = sphi 0, %s202
      %s203 = sphi 0, %s200
      %s204 = sphi 0, %s203
      %s220 = sphi 0, %s204
    $region4: #{tpu_custom_call.1} parent=1 // loop_header_branch
      %28 = sbr.rel (%p26) target = $region8
    $region5: #{tpu_custom_call.1} parent=1 // loop_body
      %s30 = ssub.s32 %s25, 1
      %s31 = ssub.s32 %s25, 2
      %s41 = sadd.s32 1, %s34
      %p42 = scmp.ge.s32.totalorder %s41, 1
      %s43 = scalar_select %p42, 0, %s41
      %s44 = sadd.s32 1, %s33
      %s45 = scalar_select %p42, %s44, %s33
      %p46 = scmp.ge.s32.totalorder %s45, 2
      %s47 = scalar_select %p46, 0, %s45
      %s48 = sadd.s32 1, %s32
      %s49 = scalar_select %p46, %s48, %s32
      %p50 = scmp.ge.s32.totalorder %s49, 2
      %s51 = scalar_select %p50, 0, %s49
      %s52 = ssub.s32 %s32, %s51
      %s53 = ssub.s32 %s33, %s47
      %s54 = sor.u32 %s52, %s53
      %s55 = ssub.s32 %s34, %s43
      %s56 = sor.u32 %s54, %s55
      %p57 = scmp.eq.s32.totalorder %s56, 0
      %s59 = sadd.s32 %s58, 1
      %s60 = scalar_select %p57, %s58, %s59
      %p63 = pneg %p57
      %p64 = scmp.eq.s32.totalorder %s25, 3
      %p65 = por %p63, %p64
      %p66 = scmp.ne.s32.totalorder %s58, %s61
      %p67 = scmp.eq.s32.totalorder %s25, 0
      %p68 = por %p66, %p67
      %p69 = scmp.ne.s32.totalorder %s58, %s61
      %p70 = scmp.eq.s32.totalorder %s30, 3
      %p71 = por %p69, %p70
      %p72 = scmp.ne.s32.totalorder %s61, %s62
      %p73 = scmp.eq.s32.totalorder %s30, 0
      %p74 = por %p72, %p73
      %p75 = scmp.ne.s32.totalorder %s61, %s62
      %p76 = scmp.eq.s32.totalorder %s31, 3
      %p77 = por %p75, %p76
      %p79 = scmp.ne.s32.totalorder %s62, %s78
      %p80 = scmp.eq.s32.totalorder %s31, 0
      %p81 = por %p79, %p80
      %s82 = ssub.s32 %s32, %s51
      %s83 = ssub.s32 %s33, %s47
      %s84 = sor.u32 %s82, %s83
      %p85 = scmp.eq.s32.totalorder %s84, 0
      %s87 = sadd.s32 %s86, 1
      %s88 = scalar_select %p85, %s86, %s87
      %p91 = pneg %p85
      %p92 = scmp.eq.s32.totalorder %s25, 3
      %p93 = por %p91, %p92
      %p94 = scmp.ne.s32.totalorder %s86, %s89
      %p95 = scmp.eq.s32.totalorder %s25, 0
      %p96 = por %p94, %p95
      %p97 = scmp.ne.s32.totalorder %s86, %s89
      %p98 = scmp.eq.s32.totalorder %s30, 3
      %p99 = por %p97, %p98
      %p100 = scmp.ne.s32.totalorder %s89, %s90
      %p101 = scmp.eq.s32.totalorder %s30, 0
      %p102 = por %p100, %p101
      %p103 = scmp.ne.s32.totalorder %s89, %s90
      %p104 = scmp.eq.s32.totalorder %s31, 3
      %p105 = por %p103, %p104
      %p107 = scmp.ne.s32.totalorder %s90, %s106
      %p108 = scmp.eq.s32.totalorder %s31, 0
      %p109 = por %p107, %p108
      %s110 = ssub.s32 %s32, %s51
      %s111 = ssub.s32 %s33, %s47
      %s112 = sor.u32 %s110, %s111
      %p113 = scmp.eq.s32.totalorder %s112, 0
      %s115 = sadd.s32 %s114, 1
      %s116 = scalar_select %p113, %s114, %s115
      %p119 = pneg %p113
      %p120 = scmp.eq.s32.totalorder %s25, 3
      %p121 = por %p119, %p120
      %p122 = scmp.ne.s32.totalorder %s114, %s117
      %p123 = scmp.eq.s32.totalorder %s25, 0
      %p124 = por %p122, %p123
      %p125 = scmp.ne.s32.totalorder %s114, %s117
      %p126 = scmp.eq.s32.totalorder %s30, 3
      %p127 = por %p125, %p126
      %p128 = scmp.ne.s32.totalorder %s117, %s118
      %p129 = scmp.eq.s32.totalorder %s30, 0
      %p130 = por %p128, %p129
      %p131 = scmp.ne.s32.totalorder %s117, %s118
      %p132 = scmp.eq.s32.totalorder %s31, 3
      %p133 = por %p131, %p132
      %p135 = scmp.ne.s32.totalorder %s118, %s134
      %p136 = scmp.eq.s32.totalorder %s31, 0
      %p137 = por %p135, %p136
      %s138 = ssub.s32 %s34, %s43
      %p139 = scmp.eq.s32.totalorder %s138, 0
      %s141 = sadd.s32 %s140, 1
      %s142 = scalar_select %p139, %s140, %s141
      %p145 = pneg %p139
      %p146 = scmp.eq.s32.totalorder %s25, 3
      %p147 = por %p145, %p146
      %p148 = scmp.ne.s32.totalorder %s140, %s143
      %p149 = scmp.eq.s32.totalorder %s25, 0
      %p150 = por %p148, %p149
      %p151 = scmp.ne.s32.totalorder %s140, %s143
      %p152 = scmp.eq.s32.totalorder %s30, 3
      %p153 = por %p151, %p152
      %p154 = scmp.ne.s32.totalorder %s143, %s144
      %p155 = scmp.eq.s32.totalorder %s30, 0
      %p156 = por %p154, %p155
      %p157 = scmp.ne.s32.totalorder %s143, %s144
      %p158 = scmp.eq.s32.totalorder %s31, 3
      %p159 = por %p157, %p158
      %p161 = scmp.ne.s32.totalorder %s144, %s160
      %p162 = scmp.eq.s32.totalorder %s31, 0
      %p163 = por %p161, %p162
      %s164 = ssub.s32 %s32, %s51
      %s165 = ssub.s32 %s33, %s47
      %s166 = sor.u32 %s164, %s165
      %s167 = ssub.s32 %s34, %s43
      %s168 = sor.u32 %s166, %s167
      %p169 = scmp.eq.s32.totalorder %s168, 0
      %s171 = sadd.s32 %s170, 1
      %s172 = scalar_select %p169, %s170, %s171
      %p175 = pneg %p169
      %p176 = scmp.eq.s32.totalorder %s25, 3
      %p177 = por %p175, %p176
      %p178 = scmp.ne.s32.totalorder %s170, %s173
      %p179 = scmp.eq.s32.totalorder %s25, 0
      %p180 = por %p178, %p179
      %p181 = scmp.ne.s32.totalorder %s170, %s173
      %p182 = scmp.eq.s32.totalorder %s30, 3
      %p183 = por %p181, %p182
      %p184 = scmp.ne.s32.totalorder %s173, %s174
      %p185 = scmp.eq.s32.totalorder %s30, 0
      %p186 = por %p184, %p185
      %p187 = scmp.ne.s32.totalorder %s173, %s174
      %p188 = scmp.eq.s32.totalorder %s31, 3
      %p189 = por %p187, %p188
      %p191 = scmp.ne.s32.totalorder %s174, %s190
      %p192 = scmp.eq.s32.totalorder %s31, 0
      %p193 = por %p191, %p192
      %s194 = ssub.s32 %s32, %s51
      %s195 = ssub.s32 %s33, %s47
      %s196 = sor.u32 %s194, %s195
      %s197 = ssub.s32 %s34, %s43
      %s198 = sor.u32 %s196, %s197
      %p199 = scmp.eq.s32.totalorder %s198, 0
      %s201 = sadd.s32 %s200, 1
      %s202 = scalar_select %p199, %s200, %s201
      %p205 = pneg %p199
      %p206 = scmp.eq.s32.totalorder %s25, 3
      %p207 = por %p205, %p206
      %p208 = scmp.ne.s32.totalorder %s200, %s203
      %p209 = scmp.eq.s32.totalorder %s25, 0
      %p210 = por %p208, %p209
      %p211 = scmp.ne.s32.totalorder %s200, %s203
      %p212 = scmp.eq.s32.totalorder %s30, 3
      %p213 = por %p211, %p212
      %p214 = scmp.ne.s32.totalorder %s203, %s204
      %p215 = scmp.eq.s32.totalorder %s30, 0
      %p216 = por %p214, %p215
      %p217 = scmp.ne.s32.totalorder %s203, %s204
      %p218 = scmp.eq.s32.totalorder %s31, 3
      %p219 = por %p217, %p218
      %p221 = scmp.ne.s32.totalorder %s204, %s220
      %p222 = scmp.eq.s32.totalorder %s31, 0
      %p223 = por %p221, %p222
      %p224 = scmp.le.s32.totalorder 1, %s25
      %p225 = scmp.lt.s32.totalorder %s25, 5
      %p226 = pnand %p224, %p225
      %p227 = pneg %p226
      // Predicated region
      $region9: #{tpu_custom_call.1} parent=5 // pred_check
        _
      $region10: #{tpu_custom_call.1} parent=5 // pred_check_branch
        %229 = sbr.rel (%p226) target = $region12
      $region11: #{tpu_custom_call.1} parent=5 // pred_region
        %s230 = ssub.s32 %s25, 1
        // Predicated region
        $region13: #{tpu_custom_call.1} parent=11 // pred_check
          %p231 = pneg %p156
        $region14: #{tpu_custom_call.1} parent=11 // pred_check_branch
          %233 = sbr.rel (%p231) target = $region16
        $region15: #{tpu_custom_call.1} parent=11 // pred_region
          %s235 = ssub.s32 128, 128
          %236 = vsyncadd [#allocation9], %s235
          %s237 = smul.addr %s37, 128
          %s238 = scalar_lea.hbm %s3, %s237
          %s240 = sshll.u32 [#allocation8], 4
          %s241 = int_to_ptr.vmem [resolvable:$true] %s240
          %243 = dma.hbm_to_vmem [thread:$0]  %s238, 128, %s241, [#allocation9]
        $region16: #{tpu_custom_call.1} parent=11 // pred_fallthru
          _
      $region12: #{tpu_custom_call.1} parent=5 // pred_fallthru
        _
      %p244 = scmp.lt.s32.totalorder %s25, 4
      // Predicated region
      $region17: #{tpu_custom_call.1} parent=5 // pred_check
        %p245 = pneg %p244
      $region18: #{tpu_custom_call.1} parent=5 // pred_check_branch
        %247 = sbr.rel (%p245) target = $region20
      $region19: #{tpu_custom_call.1} parent=5 // pred_region
        // Predicated region
        $region21: #{tpu_custom_call.1} parent=19 // pred_check
          %p248 = pneg %p68
        $region22: #{tpu_custom_call.1} parent=19 // pred_check_branch
          %250 = sbr.rel (%p248) target = $region24
        $region23: #{tpu_custom_call.1} parent=19 // pred_region
          %s251 = sand.u32 %s58, 1
          %s252 = scalar_lea.sflag [#allocation3], %s251
          %s253 = sand.u32 %s58, 1
          %s254 = smul.addr %s253, 8
          %s255 = scalar_lea.vmem [#allocation2], %s254
          %s257 = ssub.s32 128, 128
          %258 = vsyncadd %s252, %s257
          %s259 = sadd.s32 %s34, %s33
          %s260 = smul.addr %s32, 2
          %s261 = sadd.s32 %s259, %s260
          %s262 = smul.addr %s261, 128
          %s263 = scalar_lea.hbm %s0, %s262
          %s265 = sshll.u32 %s255, 4
          %s266 = int_to_ptr.vmem [resolvable:$true] %s265
          %268 = dma.hbm_to_vmem [thread:$0]  %s263, 128, %s266, %s252
        $region24: #{tpu_custom_call.1} parent=19 // pred_fallthru
          _
        // Predicated region
        $region25: #{tpu_custom_call.1} parent=19 // pred_check
          %p269 = pneg %p96
        $region26: #{tpu_custom_call.1} parent=19 // pred_check_branch
          %271 = sbr.rel (%p269) target = $region28
        $region27: #{tpu_custom_call.1} parent=19 // pred_region
          %s272 = sand.u32 %s25, 1
          %s273 = scalar_lea.sflag [#allocation6], %s272
          %s274 = sand.u32 %s86, 1
          %s275 = smul.addr %s274, 8
          %s276 = scalar_lea.vmem [#allocation5], %s275
          %s278 = ssub.s32 128, 128
          %279 = vsyncadd %s273, %s278
          %s280 = smul.addr %s32, 2
          %s281 = sadd.s32 %s33, %s280
          %s282 = smul.addr %s281, 128
          %s283 = scalar_lea.hbm %s1, %s282
          %s285 = sshll.u32 %s276, 4
          %s286 = int_to_ptr.vmem [resolvable:$true] %s285
          %288 = dma.hbm_to_vmem [thread:$0]  %s283, 128, %s286, %s273
        $region28: #{tpu_custom_call.1} parent=19 // pred_fallthru
          _
        // Predicated region
        $region29: #{tpu_custom_call.1} parent=19 // pred_check
          %p289 = pneg %p124
        $region30: #{tpu_custom_call.1} parent=19 // pred_check_branch
          %291 = sbr.rel (%p289) target = $region32
        $region31: #{tpu_custom_call.1} parent=19 // pred_region
          %s292 = sand.u32 %s25, 1
          %s293 = scalar_lea.sflag [#allocation6], %s292
          %s294 = sand.u32 %s114, 1
          %s295 = smul.addr %s294, 8
          %s296 = scalar_lea.vmem [#allocation7], %s295
          %s298 = ssub.s32 128, 128
          %299 = vsyncadd %s293, %s298
          %s300 = smul.addr %s32, 2
          %s301 = sadd.s32 %s33, %s300
          %s302 = smul.addr %s301, 128
          %s303 = scalar_lea.hbm %s2, %s302
          %s305 = sshll.u32 %s296, 4
          %s306 = int_to_ptr.vmem [resolvable:$true] %s305
          %308 = dma.hbm_to_vmem [thread:$0]  %s303, 128, %s306, %s293
        $region32: #{tpu_custom_call.1} parent=19 // pred_fallthru
          _
      $region20: #{tpu_custom_call.1} parent=5 // pred_fallthru
        _
      %p309 = scmp.le.s32.totalorder 1, %s25
      %p310 = scmp.lt.s32.totalorder %s25, 5
      %p311 = pnand %p309, %p310
      %p312 = pneg %p311
      // Predicated region
      $region33: #{tpu_custom_call.1} parent=5 // pred_check
        _
      $region34: #{tpu_custom_call.1} parent=5 // pred_check_branch
        %314 = sbr.rel (%p311) target = $region36
      $region35: #{tpu_custom_call.1} parent=5 // pred_region
        %s315 = ssub.s32 %s25, 1
        %s316 = sand.u32 %s61, 1
        %s317 = scalar_lea.sflag [#allocation3], %s316
        %s318 = sand.u32 %s61, 1
        %s319 = smul.addr %s318, 8
        %s320 = scalar_lea.vmem [#allocation2], %s319
        // Predicated region
        $region37: #{tpu_custom_call.1} parent=35 // pred_check
          %p321 = pneg %p74
        $region38: #{tpu_custom_call.1} parent=35 // pred_check_branch
          %323 = sbr.rel (%p321) target = $region40
        $region39: #{tpu_custom_call.1} parent=35 // pred_region
          %324 = dma.done %s317, 128
        $region40: #{tpu_custom_call.1} parent=35 // pred_fallthru
          _
        %s325 = sand.u32 %s30, 1
        %s326 = scalar_lea.sflag [#allocation6], %s325
        %s327 = sand.u32 %s89, 1
        %s328 = smul.addr %s327, 8
        %s329 = scalar_lea.vmem [#allocation5], %s328
        // Predicated region
        $region41: #{tpu_custom_call.1} parent=35 // pred_check
          %p330 = pneg %p102
        $region42: #{tpu_custom_call.1} parent=35 // pred_check_branch
          %332 = sbr.rel (%p330) target = $region44
        $region43: #{tpu_custom_call.1} parent=35 // pred_region
          %333 = dma.done %s326, 128
        $region44: #{tpu_custom_call.1} parent=35 // pred_fallthru
          _
        %s334 = sand.u32 %s30, 1
        %s335 = scalar_lea.sflag [#allocation6], %s334
        %s336 = sand.u32 %s117, 1
        %s337 = smul.addr %s336, 8
        %s338 = scalar_lea.vmem [#allocation7], %s337
        // Predicated region
        $region45: #{tpu_custom_call.1} parent=35 // pred_check
          %p339 = pneg %p130
        $region46: #{tpu_custom_call.1} parent=35 // pred_check_branch
          %341 = sbr.rel (%p339) target = $region48
        $region47: #{tpu_custom_call.1} parent=35 // pred_region
          %342 = dma.done %s335, 128
        $region48: #{tpu_custom_call.1} parent=35 // pred_fallthru
          _
        // Predicated region
        $region49: #{tpu_custom_call.1} parent=35 // pred_check
          %p343 = pneg %p156
        $region50: #{tpu_custom_call.1} parent=35 // pred_check_branch
          %345 = sbr.rel (%p343) target = $region52
        $region51: #{tpu_custom_call.1} parent=35 // pred_region
          %346 = dma.done [#allocation9], 128
        $region52: #{tpu_custom_call.1} parent=35 // pred_fallthru
          _
        %s347 = sand.u32 %s61, 1
        %s348 = scalar_lea.sflag [#allocation3], %s347
        %s349 = sand.u32 %s61, 1
        %s350 = smul.addr %s349, 8
        %s351 = scalar_lea.vmem [#allocation2], %s350
        %p352 = pneg %p74
        %p353 = pneg %p71
        %s354 = sand.u32 %s30, 1
        %s355 = scalar_lea.sflag [#allocation6], %s354
        %s356 = sand.u32 %s89, 1
        %s357 = smul.addr %s356, 8
        %s358 = scalar_lea.vmem [#allocation5], %s357
        %p359 = pneg %p102
        %p360 = pneg %p99
        %s361 = sand.u32 %s30, 1
        %s362 = scalar_lea.sflag [#allocation6], %s361
        %s363 = sand.u32 %s117, 1
        %s364 = smul.addr %s363, 8
        %s365 = scalar_lea.vmem [#allocation7], %s364
        %p366 = pneg %p130
        %p367 = pneg %p127
        %p368 = pneg %p156
        %p369 = pneg %p153
        %p370 = pneg %p186
        %p371 = pneg %p183
        %s372 = sand.u32 %s173, 1
        %s373 = scalar_lea.sflag [#allocation4], %s372
        %s374 = sand.u32 %s173, 1
        %s375 = smul.addr %s374, 8
        %s376 = scalar_lea.vmem [#allocation10], %s375
        %p377 = pneg %p216
        %p378 = pneg %p213
        %s379 = sand.u32 %s203, 1
        %s380 = scalar_lea.sflag [#allocation12], %s379
        %s381 = sand.u32 %s203, 1
        %s382 = smul.addr %s381, 8
        %s383 = scalar_lea.vmem [#allocation11], %s382
        %v384 = vld [vmem:[%s320] sm:$0xff]
        %v385 = vld [vmem:[%s329] sm:$0xff]
        %v386 = vld [vmem:[%s338] sm:$0xff]
        %v387 = vmul.f32 %v384, 0.17677669
        %v388 = vld [vmem:[#allocation8] sm:$0xff]
        %vm389 = vcmask 261120
        %v391 = vsel %vm389, %v387, 0
        %v394 = vsel %vm389, %v385, 0
        %396 = vmatprep.subr.mxu0 0.0
        %397 = vmatpush1.xpose.msra.mxu0 0.0
        %398 = vmatprep.subr.mxu0 0.0
        %399 = vmatpush1.xpose.msra.mxu0 0.0
        %400 = vmatprep.subr.mxu0 0.0
        %401 = vmatpush1.xpose.msra.mxu0 0.0
        %402 = vmatprep.subr.mxu0 0.0
        %403 = vmatpush1.xpose.msra.mxu0 0.0
        %404 = vmatprep.subr.mxu0 0.0
        %405 = vmatpush1.xpose.msra.mxu0 0.0
        %406 = vmatprep.subr.mxu0 0.0
        %407 = vmatpush1.xpose.msra.mxu0 0.0
        %408 = vmatprep.subr.mxu0 0.0
        %409 = vmatpush1.xpose.msra.mxu0 0.0
        %410 = vmatprep.subr.mxu0 0.0
        %411 = vmatpush1.xpose.msra.mxu0 0.0
        %412 = vmatprep.subr.mxu0 0.0
        %413 = vmatpush1.xpose.msra.mxu0 0.0
        %414 = vmatprep.subr.mxu0 0.0
        %415 = vmatpush1.xpose.msra.mxu0 0.0
        %416 = vmatprep.subr.mxu0 0.0
        %417 = vmatpush1.xpose.msra.mxu0 0.0
        %418 = vmatprep.subr.mxu0 0.0
        %419 = vmatpush1.xpose.msra.mxu0 0.0
        %420 = vmatprep.subr.mxu0 0.0
        %421 = vmatpush1.xpose.msra.mxu0 0.0
        %422 = vmatprep.subr.mxu0 0.0
        %423 = vmatpush1.xpose.msra.mxu0 0.0
        %424 = vmatprep.subr.mxu0 0.0
        %425 = vmatpush1.xpose.msra.mxu0 0.0
        %426 = vmatprep.subr.mxu0 0.0
        %427 = vmatpush1.xpose.msra.mxu0 %v394
        %428 = vmatprep.subr.mxu0 0.0
        %429 = vmatpush2.xpose.msra.mxu0 0.0
        %430 = vmatprep.subr.mxu0 0.0
        %431 = vmatpush2.xpose.msra.mxu0 0.0
        %432 = vmatprep.subr.mxu0 0.0
        %433 = vmatpush2.xpose.msra.mxu0 0.0
        %434 = vmatprep.subr.mxu0 0.0
        %435 = vmatpush2.xpose.msra.mxu0 0.0
        %436 = vmatprep.subr.mxu0 0.0
        %437 = vmatpush2.xpose.msra.mxu0 0.0
        %438 = vmatprep.subr.mxu0 0.0
        %439 = vmatpush2.xpose.msra.mxu0 0.0
        %440 = vmatprep.subr.mxu0 0.0
        %441 = vmatpush2.xpose.msra.mxu0 0.0
        %442 = vmatprep.subr.mxu0 0.0
        %443 = vmatpush2.xpose.msra.mxu0 0.0
        %444 = vmatprep.subr.mxu0 0.0
        %445 = vmatpush2.xpose.msra.mxu0 0.0
        %446 = vmatprep.subr.mxu0 0.0
        %447 = vmatpush2.xpose.msra.mxu0 0.0
        %448 = vmatprep.subr.mxu0 0.0
        %449 = vmatpush2.xpose.msra.mxu0 0.0
        %450 = vmatprep.subr.mxu0 0.0
        %451 = vmatpush2.xpose.msra.mxu0 0.0
        %452 = vmatprep.subr.mxu0 0.0
        %453 = vmatpush2.xpose.msra.mxu0 0.0
        %454 = vmatprep.subr.mxu0 0.0
        %455 = vmatpush2.xpose.msra.mxu0 0.0
        %456 = vmatprep.subr.mxu0 0.0
        %457 = vmatpush2.xpose.msra.mxu0 0.0
        %458 = vmatprep.subr.mxu0 0.0
        %459 = vmatpush2.xpose.msra.mxu0 0.0
        %460 = vmatprep.mubr.f32.mxu0 0.0
        %461 = vmatmul.mubr.f32.gmra.mxu0 %v391
        %v462 = vpop.f32.mrf.mxu0
        %v463 = vadd.f32 %v388, %v462
        %v464 = vpop.f32.mrf.mxu0
        %465 = vdwg.mxu0
        %vm466 = vcmask 64512
        %v467 = vsel %vm466, %v463, -inf
        %468 = vmax.xlane.f32.xlu0 %v467
        %v469 = vpop.xlane.xlu0 %468
        %v470 = vsub.f32 %v463, %v469
        %v471 = vmul.f32 %v470, 1.442695
        %v472 = vpow.pop %v471
        %v473 = vsel %vm466, %v472, 0.0
        %474 = vadd.xlane.f32.xlu0 %v473
        %v475 = vpop.xlane.xlu0 %474
        %v476 = vrcp.pop %v475
        %v477 = vmul.f32 %v472, %v476
        %v479 = vsel %vm466, %v477, 0
        %481 = vmatprep.subr.mxu0 0.0
        %482 = vmatpush1.msra.mxu0 0.0
        %483 = vmatprep.subr.mxu0 0.0
        %484 = vmatpush1.msra.mxu0 0.0
        %485 = vmatprep.subr.mxu0 0.0
        %486 = vmatpush1.msra.mxu0 0.0
        %487 = vmatprep.subr.mxu0 0.0
        %488 = vmatpush1.msra.mxu0 0.0
        %489 = vmatprep.subr.mxu0 0.0
        %490 = vmatpush1.msra.mxu0 0.0
        %491 = vmatprep.subr.mxu0 0.0
        %492 = vmatpush1.msra.mxu0 0.0
        %493 = vmatprep.subr.mxu0 0.0
        %494 = vmatpush1.msra.mxu0 0.0
        %495 = vmatprep.subr.mxu0 0.0
        %496 = vmatpush1.msra.mxu0 0.0
        %497 = vmatprep.subr.mxu0 0.0
        %498 = vmatpush1.msra.mxu0 0.0
        %499 = vmatprep.subr.mxu0 0.0
        %500 = vmatpush1.msra.mxu0 0.0
        %501 = vmatprep.subr.mxu0 0.0
        %502 = vmatpush1.msra.mxu0 0.0
        %503 = vmatprep.subr.mxu0 0.0
        %504 = vmatpush1.msra.mxu0 0.0
        %505 = vmatprep.subr.mxu0 0.0
        %506 = vmatpush1.msra.mxu0 0.0
        %507 = vmatprep.subr.mxu0 0.0
        %508 = vmatpush1.msra.mxu0 0.0
        %509 = vmatprep.subr.mxu0 0.0
        %510 = vmatpush1.msra.mxu0 0.0
        %511 = vmatprep.subr.mxu0 0.0
        %512 = vmatpush1.msra.mxu0 %v386
        %513 = vmatprep.subr.mxu0 0.0
        %514 = vmatpush2.msra.mxu0 0.0
        %515 = vmatprep.subr.mxu0 0.0
        %516 = vmatpush2.msra.mxu0 0.0
        %517 = vmatprep.subr.mxu0 0.0
        %518 = vmatpush2.msra.mxu0 0.0
        %519 = vmatprep.subr.mxu0 0.0
        %520 = vmatpush2.msra.mxu0 0.0
        %521 = vmatprep.subr.mxu0 0.0
        %522 = vmatpush2.msra.mxu0 0.0
        %523 = vmatprep.subr.mxu0 0.0
        %524 = vmatpush2.msra.mxu0 0.0
        %525 = vmatprep.subr.mxu0 0.0
        %526 = vmatpush2.msra.mxu0 0.0
        %527 = vmatprep.subr.mxu0 0.0
        %528 = vmatpush2.msra.mxu0 0.0
        %529 = vmatprep.subr.mxu0 0.0
        %530 = vmatpush2.msra.mxu0 0.0
        %531 = vmatprep.subr.mxu0 0.0
        %532 = vmatpush2.msra.mxu0 0.0
        %533 = vmatprep.subr.mxu0 0.0
        %534 = vmatpush2.msra.mxu0 0.0
        %535 = vmatprep.subr.mxu0 0.0
        %536 = vmatpush2.msra.mxu0 0.0
        %537 = vmatprep.subr.mxu0 0.0
        %538 = vmatpush2.msra.mxu0 0.0
        %539 = vmatprep.subr.mxu0 0.0
        %540 = vmatpush2.msra.mxu0 0.0
        %541 = vmatprep.subr.mxu0 0.0
        %542 = vmatpush2.msra.mxu0 0.0
        %543 = vmatprep.subr.mxu0 0.0
        %544 = vmatpush2.msra.mxu0 0.0
        %545 = vmatprep.mubr.f32.mxu0 0.0
        %546 = vmatmul.mubr.f32.gmra.mxu0 %v479
        %v547 = vpop.f32.mrf.mxu0
        %v548 = vadd.f32 0.0, %v547
        %v549 = vpop.f32.mrf.mxu0
        %550 = vdwg.mxu0
        %551 = vst.msk [vmem:[%s376] sm:$0xff] %vm389, %v548
        %552 = vst.msk [vmem:[%s383] sm:$0xff] %vm466, %v477
        %s553 = sand.u32 %s173, 1
        %s554 = scalar_lea.sflag [#allocation4], %s553
        %s555 = sand.u32 %s173, 1
        %s556 = smul.addr %s555, 8
        %s557 = scalar_lea.vmem [#allocation10], %s556
        %s558 = sand.u32 %s203, 1
        %s559 = scalar_lea.sflag [#allocation12], %s558
        %s560 = sand.u32 %s203, 1
        %s561 = smul.addr %s560, 8
        %s562 = scalar_lea.vmem [#allocation11], %s561
        // Predicated region
        $region53: #{tpu_custom_call.1} parent=35 // pred_check
          %p563 = pneg %p183
        $region54: #{tpu_custom_call.1} parent=35 // pred_check_branch
          %565 = sbr.rel (%p563) target = $region56
        $region55: #{tpu_custom_call.1} parent=35 // pred_region
          %s567 = ssub.s32 128, 128
          %568 = vsyncadd %s554, %s567
          %s569 = sadd.s32 %s37, %s36
          %s570 = smul.addr %s35, 2
          %s571 = sadd.s32 %s569, %s570
          %s572 = smul.addr %s571, 128
          %s573 = scalar_lea.hbm %s4, %s572
          %s575 = sshll.u32 %s557, 4
          %s576 = int_to_ptr.vmem [resolvable:$true] %s575
          %578 = dma.vmem_to_hbm [thread:$0]  %s576, 128, %s573, %s554
        $region56: #{tpu_custom_call.1} parent=35 // pred_fallthru
          _
        // Predicated region
        $region57: #{tpu_custom_call.1} parent=35 // pred_check
          %p579 = pneg %p213
        $region58: #{tpu_custom_call.1} parent=35 // pred_check_branch
          %581 = sbr.rel (%p579) target = $region60
        $region59: #{tpu_custom_call.1} parent=35 // pred_region
          %s583 = ssub.s32 128, 128
          %584 = vsyncadd %s559, %s583
          %s585 = sadd.s32 %s37, %s36
          %s586 = smul.addr %s35, 2
          %s587 = sadd.s32 %s585, %s586
          %s588 = smul.addr %s587, 128
          %s589 = scalar_lea.hbm %s5, %s588
          %s591 = sshll.u32 %s562, 4
          %s592 = int_to_ptr.vmem [resolvable:$true] %s591
          %594 = dma.vmem_to_hbm [thread:$0]  %s592, 128, %s589, %s559
        $region60: #{tpu_custom_call.1} parent=35 // pred_fallthru
          _
      $region36: #{tpu_custom_call.1} parent=5 // pred_fallthru
        _
      %p595 = scmp.le.s32.totalorder 2, %s25
      // Predicated region
      $region61: #{tpu_custom_call.1} parent=5 // pred_check
        %p596 = pneg %p595
      $region62: #{tpu_custom_call.1} parent=5 // pred_check_branch
        %598 = sbr.rel (%p596) target = $region64
      $region63: #{tpu_custom_call.1} parent=5 // pred_region
        %s599 = ssub.s32 %s25, 2
        // Predicated region
        $region65: #{tpu_custom_call.1} parent=63 // pred_check
          %p600 = pneg %p189
        $region66: #{tpu_custom_call.1} parent=63 // pred_check_branch
          %602 = sbr.rel (%p600) target = $region68
        $region67: #{tpu_custom_call.1} parent=63 // pred_region
          %s603 = sand.u32 %s174, 1
          %s604 = scalar_lea.sflag [#allocation4], %s603
          %s605 = sand.u32 %s174, 1
          %s606 = smul.addr %s605, 8
          %s607 = scalar_lea.vmem [#allocation10], %s606
          %608 = dma.done %s604, 128
        $region68: #{tpu_custom_call.1} parent=63 // pred_fallthru
          _
        // Predicated region
        $region69: #{tpu_custom_call.1} parent=63 // pred_check
          %p609 = pneg %p219
        $region70: #{tpu_custom_call.1} parent=63 // pred_check_branch
          %611 = sbr.rel (%p609) target = $region72
        $region71: #{tpu_custom_call.1} parent=63 // pred_region
          %s612 = sand.u32 %s204, 1
          %s613 = scalar_lea.sflag [#allocation12], %s612
          %s614 = sand.u32 %s204, 1
          %s615 = smul.addr %s614, 8
          %s616 = scalar_lea.vmem [#allocation11], %s615
          %617 = dma.done %s613, 128
        $region72: #{tpu_custom_call.1} parent=63 // pred_fallthru
          _
      $region64: #{tpu_custom_call.1} parent=5 // pred_fallthru
        _
    $region6: #{tpu_custom_call.1} parent=1 // loop_footer
      %s29 = sadd.s32 1, %s25
    $region7: #{tpu_custom_call.1} parent=1 // loop_footer_branch
      %24 = sbr.rel target = $region3
    $region8: #{tpu_custom_call.1} parent=1 // loop_exit
      _
    %618 = vsyncpa [#allocation3], 1
    %s619 = scalar_lea.sflag [#allocation3], 1
    %620 = vsyncpa %s619, 1
    %621 = vsyncpa [#allocation6], 1
    %s622 = scalar_lea.sflag [#allocation6], 1
    %623 = vsyncpa %s622, 1
    %624 = vsyncpa [#allocation9], 1
    %625 = vsyncpa [#allocation4], 1
    %s626 = scalar_lea.sflag [#allocation4], 1
    %627 = vsyncpa %s626, 1
    %628 = vsyncpa [#allocation12], 1
    %s629 = scalar_lea.sflag [#allocation12], 1
    %630 = vsyncpa %s629, 1

</llo_original>
